<compile_context>
chip_gen: v6e
topology: v6e:2x2x1
jax: 0.10.0
libtpu: 0.0.40
codegen_flags: <defaults>
</compile_context>

<pallas_src>
import functools
import numpy as np
import jax
import jax.numpy as jnp
from jax.experimental import pallas as pl
from jax.experimental.pallas import tpu as pltpu


def _cdiv(a, b):
    return (a + b - 1) // b


def _round_up(x, m):
    return ((x + m - 1) // m) * m


# ---------------------------------------------------------------------------
# Kernel 1: gabor filter bank generation (runs once, tiled over BU chunks).
# ---------------------------------------------------------------------------
def gabor_bank_kernel(grid_ref, prm_ref, g_ref):
    # grid_ref: (2, S2)    row 0 = flattened basegrid_x (col = k % S),
    #                      row 1 = flattened basegrid_y (row = k // S)
    # prm_ref:  (bu_t, 8)  cols = [loc0, loc1, cos(ori), sin(ori),
    #                              1/sigma0, 1/sigma1, 2*pi*freq, phase]
    # g_ref:    (bu_t, S2) gabor bank chunk
    bx = grid_ref[0:1, :]
    by = grid_ref[1:2, :]
    loc0 = prm_ref[:, 0:1]
    loc1 = prm_ref[:, 1:2]
    cos_o = prm_ref[:, 2:3]
    sin_o = prm_ref[:, 3:4]
    inv_sig0 = prm_ref[:, 4:5]
    inv_sig1 = prm_ref[:, 5:6]
    freq2pi = prm_ref[:, 6:7]
    phase = prm_ref[:, 7:8]

    # _generate_grid (broadcast (bu_t,1) against (1,S2))
    x_pts = bx - loc0                                # (bu_t, S2)
    y_pts = by - loc1                                # (bu_t, S2)
    pattern_y = y_pts * cos_o - x_pts * sin_o
    pattern_x = y_pts * sin_o + x_pts * cos_o

    # _generate_gabor_inner (divisions replaced by reciprocal multiplies)
    x_w = pattern_x * inv_sig0
    y_h = pattern_y * inv_sig1
    envelope = jnp.exp(-0.5 * (x_w * x_w) - 0.5 * (y_h * y_h))
    gabor = envelope * 0.5 * jnp.cos(freq2pi * pattern_y + phase)
    g_ref[...] = gabor.astype(g_ref.dtype)           # f32 math, cast on store


# ---------------------------------------------------------------------------
# Kernel 2: per-stimulus-tile response (pure MXU + VPU, tiled over N rows).
# ---------------------------------------------------------------------------
def response_kernel(g_ref, scale_ref, bias_ref, outb_ref, x_ref, o_ref, *,
                    use_selector, num_b):
    # g_ref:     (BU, S2)  gabor bank (resident across grid steps)
    # scale_ref: (B, BU)   block-diag selector carrying output_a   [selector]
    #            (BU, 1)   output_a column                         [otherwise]
    # bias_ref:  (BU, 1)
    # outb_ref:  (B, 1)
    # x_ref:     (tn, S2)  stimulus row tile (no wrapper transpose/pad)
    # o_ref:     (B, tn)   lane-dense output tile
    resp = jax.lax.dot_general(
        g_ref[...], x_ref[...],
        dimension_numbers=(((1,), (1,)), ((), ())),   # contract S2 of both
        preferred_element_type=jnp.float32)           # (BU, tn) on MXU
    act = jnp.maximum(resp + bias_ref[...], 0.0)      # + bias, relu
    act = act * act                                   # ** 2
    if use_selector:
        # output_a scaling + sum over units folded into one small MXU matmul.
        summed = jax.lax.dot_general(
            scale_ref[...], act,
            dimension_numbers=(((1,), (0,)), ((), ())),
            preferred_element_type=jnp.float32)       # (B, tn)
    else:
        # Large-B path: VPU scale then per-B sublane reduction over U.
        scaled = act * scale_ref[...]                 # (BU, tn) * (BU, 1)
        bu, tn = scaled.shape
        summed = scaled.reshape(num_b, bu // num_b, tn).sum(axis=1)
    o_ref[...] = summed + outb_ref[...]               # + output_b


def _response_call(gabor, scale, bias, outb, x2d, *, B, BU, S2, N, tn,
                   use_selector, resident_bufs, vmem_limit, cost):
    kernel = functools.partial(response_kernel,
                               use_selector=use_selector, num_b=B)
    res_kw = ({} if resident_bufs is None
              else dict(pipeline_mode=pl.Buffered(resident_bufs)))
    scale_shape = (B, BU) if use_selector else (BU, 1)
    return pl.pallas_call(
        kernel,
        out_shape=jax.ShapeDtypeStruct((B, N), jnp.float32),
        grid=(_cdiv(N, tn),),                         # ragged last tile OK
        in_specs=[
            pl.BlockSpec((BU, S2), lambda j: (0, 0), **res_kw),   # bank (resident)
            pl.BlockSpec(scale_shape, lambda j: (0, 0), **res_kw),
            pl.BlockSpec((BU, 1), lambda j: (0, 0), **res_kw),
            pl.BlockSpec((B, 1), lambda j: (0, 0), **res_kw),
            pl.BlockSpec((tn, S2), lambda j: (j, 0)),             # x row tile
        ],
        out_specs=pl.BlockSpec((B, tn), lambda j: (0, j)),
        compiler_params=pltpu.CompilerParams(
            dimension_semantics=("parallel",),        # megacore on v7x only
            vmem_limit_bytes=vmem_limit),
        cost_estimate=cost,
    )(gabor, scale, bias, outb, x2d)


# ---------------------------------------------------------------------------
# Wrapper
# ---------------------------------------------------------------------------
def gabor_simple_cell_forward(x_nchw, params, imsize, B, U, *,
                              tile_n=1024, use_bf16=True, use_selector=None):
    S = imsize
    S2 = S * S
    N = int(x_nchw.shape[0])
    BU = B * U

    x_dtype = jnp.bfloat16 if use_bf16 else jnp.float32

    # Stimuli stay (N, S2) in HBM — the reshape of a contiguous (N,1,S,S)
    # array is free.  No transpose, no pad (extra HBM passes removed).  The
    # bf16 cast is one pass, amortized over repeated forwards on fixed x.
    x2d = x_nchw.reshape(N, S2).astype(x_dtype)

    # Lane-dense N tile; clamp so the grid has >= 2 steps (both v7x TCs work).
    tn = max(128, min(_round_up(tile_n, 128), _round_up(_cdiv(N, 2), 128)))

    # Base grids, flattened row-major (k = row*S + col).
    base = jnp.linspace(-S / 2 + 0.5, S / 2 - 0.5, S, dtype=jnp.float32) / S
    bx_flat = jnp.tile(base, S)          # col = k % S
    by_flat = jnp.repeat(-base, S)       # row = k // S
    grid_xy = jnp.stack([bx_flat, by_flat], axis=0)               # (2, S2)

    # Per-unit params packed into one (BU, 8) array; constants folded here.
    def col(p):
        return jnp.asarray(p, jnp.float32).reshape(BU)

    ori = col(params['orientation'])
    packed = jnp.stack([
        col(params['loc'][0]), col(params['loc'][1]),
        jnp.cos(ori), jnp.sin(ori),
        1.0 / col(params['sigma'][0]), 1.0 / col(params['sigma'][1]),
        (2.0 * np.pi) * col(params['frequency']),
        col(params['phase']),
    ], axis=1)                                                    # (BU, 8)

    bias = col(params['bias']).reshape(BU, 1)
    outb = jnp.asarray(params['output_b'], jnp.float32).reshape(B, 1)
    output_a = jnp.asarray(params['output_a'], jnp.float32).reshape(B, U)

    if use_selector is None:
        use_selector = B <= 8            # selector matmul is O(B^2*U*tn)
    if use_selector:
        # Block-diagonal selector: sel[b, b*U + u] = output_a[b, u]
        scale = (jnp.eye(B, dtype=jnp.float32)[:, :, None]
                 * output_a[None, :, :]).reshape(B, BU)
    else:
        scale = output_a.reshape(BU, 1)

    # ---- pass 1: gabor bank (exp/cos once, tiled over BU chunks) ----------
    if BU % 8 == 0:
        bu_cap = max(8, ((1 << 20) // (S2 * 4)) // 8 * 8)  # ~1 MiB f32 temps
        bu_t = min(BU, bu_cap)
    else:
        bu_t = BU
    gabor = pl.pallas_call(
        gabor_bank_kernel,
        out_shape=jax.ShapeDtypeStruct((BU, S2), x_dtype),
        grid=(_cdiv(BU, bu_t),),
        in_specs=[pl.BlockSpec((2, S2), lambda i: (0, 0)),
                  pl.BlockSpec((bu_t, 8), lambda i: (i, 0))],
        out_specs=pl.BlockSpec((bu_t, S2), lambda i: (i, 0)),
        compiler_params=pltpu.CompilerParams(
            dimension_semantics=("parallel",)),
    )(grid_xy, packed)

    # ---- pass 2: matmul + nonlinearity, pipelined over N row tiles --------
    x_item = jnp.dtype(x_dtype).itemsize
    flops = 2 * BU * S2 * N + (2 * B * BU * N if use_selector else 2 * BU * N)
    bytes_accessed = (N * S2 * x_item + BU * S2 * x_item
                      + B * N * 4 + (B * BU + BU + B) * 4)
    cost = pl.CostEstimate(flops=flops, transcendentals=0,
                           bytes_accessed=bytes_accessed)

    resident_bytes = BU * S2 * x_item + (B * BU + BU + B) * 4
    demand = (2 * tn * S2 * x_item          # double-buffered x tiles
              + resident_bytes              # resident operands
              + 2 * B * tn * 4)             # double-buffered output tiles
    vmem_limit = max(8 << 20, int(1.5 * demand) + (1 << 20))

    common = dict(B=B, BU=BU, S2=S2, N=N, tn=tn, use_selector=use_selector,
                  vmem_limit=vmem_limit, cost=cost)
    try:
        # Single-buffer the constant-index-map resident operands (v7x VMEM).
        out = _response_call(gabor, scale, bias, outb, x2d,
                             resident_bufs=1, **common)
    except Exception:
        # pipeline_mode=Buffered(1) not supported by this Pallas build ->
        # fall back to default double buffering (identical semantics).
        out = _response_call(gabor, scale, bias, outb, x2d,
                             resident_bufs=None, **common)
    return out


# ---------------------------------------------------------------------------
# Pure-JAX replica of the PyTorch forward (for verification).
# ---------------------------------------------------------------------------
def reference_forward(x_nchw, params, imsize, B, U):
    S = imsize
    base = jnp.linspace(-S / 2 + 0.5, S / 2 - 0.5, S, dtype=jnp.float32) / S
    bx, by = base, -base
    loc = jnp.asarray(params['loc'], jnp.float32)
    x_points = bx[None, None, :] - loc[0][..., None]       # (B, U, S)
    y_points = by[None, None, :] - loc[1][..., None]       # (B, U, S)
    cos_o = jnp.cos(params['orientation'])[..., None, None]
    sin_o = jnp.sin(params['orientation'])[..., None, None]
    y_e = y_points[..., :, None]
    x_e = x_points[..., None, :]
    pattern_y = y_e * cos_o - x_e * sin_o
    pattern_x = y_e * sin_o + x_e * cos_o
    x_w = pattern_x / params['sigma'][0][..., None, None]
    y_h = pattern_y / params['sigma'][1][..., None, None]
    p = jnp.exp(-0.5 * x_w * x_w - 0.5 * y_h * y_h)
    gabor = p * 0.5 * jnp.cos(
        2 * np.pi * params['frequency'][..., None, None] * pattern_y
        + params['phase'][..., None, None])
    N = x_nchw.shape[0]
    xr = x_nchw.reshape(N, S * S)
    g = gabor.reshape(B, U, S * S)
    out = jnp.einsum('nk,buk->bun', xr, g) + params['bias'][..., None]
    out = jnp.maximum(out, 0.0) ** 2
    out = (out * params['output_a'][..., None]).sum(axis=1)
    return out + params['output_b'][:, None]


if __name__ == "__main__":
    imsize, B, U, N = 16, 2, 8, 200       # image size, model batch, units, stimuli
    key = jax.random.PRNGKey(0)
    ks = jax.random.split(key, 9)

    portion = 30.0 / (imsize / 0.5)
    sigma_lo, sigma_hi = 2.0 / imsize, 4.0 / imsize
    params = {
        'loc': jax.random.uniform(ks[0], (2, B, U)) * portion - portion / 2,
        'sigma': jax.random.uniform(ks[1], (2, B, U)) * (sigma_hi - sigma_lo) + sigma_lo,
        'orientation': jax.random.uniform(ks[2], (B, U)) * np.pi,
        'frequency': jax.random.uniform(ks[3], (B, U)) * 6.0 + 2.0,
        'phase': jax.random.uniform(ks[4], (B, U)) * 2.0 * np.pi,
        'bias': 0.1 * jax.random.normal(ks[5], (B, U), dtype=jnp.float32),
        'output_a': jax.random.uniform(ks[6], (B, U)) + 0.5,
        'output_b': jax.random.normal(ks[7], (B,), dtype=jnp.float32),
    }
    x = jax.random.normal(ks[8], (N, 1, imsize, imsize), dtype=jnp.float32)

    ref = reference_forward(x, params, imsize, B, U)

    # f32 path: strict correctness check.  tn clamps to 128 -> 2-step grid.
    out_f32 = jax.block_until_ready(
        gabor_simple_cell_forward(x, params, imsize, B, U, use_bf16=False))
    assert out_f32.shape == (B, N)
    np.testing.assert_allclose(np.asarray(out_f32), np.asarray(ref),
                               rtol=2e-3, atol=5e-4)

    # Default bf16 path (halved x HBM stream, f32 MXU accumulation).
    out_bf16 = jax.block_until_ready(
        gabor_simple_cell_forward(x, params, imsize, B, U))
    np.testing.assert_allclose(np.asarray(out_bf16), np.asarray(ref),
                               rtol=5e-2, atol=5e-2)

    # Large-B reduction path (VPU output_a multiply + per-B sum over U).
    out_alt = jax.block_until_ready(
        gabor_simple_cell_forward(x, params, imsize, B, U,
                                  use_bf16=False, use_selector=False))
    np.testing.assert_allclose(np.asarray(out_alt), np.asarray(ref),
                               rtol=2e-3, atol=5e-4)

    print("KERNEL_OK")
</pallas_src>

<mosaic_0001>
module attributes {stable_mosaic.version = 11 : i64} {
  func.func @gabor_bank_kernel(%arg0: i32, %arg1: memref<2x256xf32, #tpu.memory_space<vmem>>, %arg2: memref<16x8xf32, #tpu.memory_space<vmem>>, %arg3: memref<16x256xf32, #tpu.memory_space<vmem>>) attributes {dimension_semantics = [#tpu.dimension_semantics<parallel>], iteration_bounds = array<i64: 1>, scalar_prefetch = 0 : i64, scratch_operands = 0 : i64, tpu.core_type = #tpu.core_type<tc>, window_params = [{pipeline_mode = #tpu.pipeline_mode<synchronous>, transform_indices = @transform_0, window_bounds = array<i64: 2, 256>}, {transform_indices = @transform_1, window_bounds = array<i64: 16, 8>}, {transform_indices = @transform_2, window_bounds = array<i64: 16, 256>}]} {
    %c0 = arith.constant 0 : index
    %c0_0 = arith.constant 0 : index
    %0 = vector.load %arg1[%c0, %c0_0] : memref<2x256xf32, #tpu.memory_space<vmem>>, vector<1x256xf32>
    %c1 = arith.constant 1 : index
    %c0_1 = arith.constant 0 : index
    %1 = vector.load %arg1[%c1, %c0_1] : memref<2x256xf32, #tpu.memory_space<vmem>>, vector<1x256xf32>
    %c0_2 = arith.constant 0 : index
    %c0_3 = arith.constant 0 : index
    %2 = vector.load %arg2[%c0_2, %c0_3] : memref<16x8xf32, #tpu.memory_space<vmem>>, vector<16x1xf32>
    %c0_4 = arith.constant 0 : index
    %c1_5 = arith.constant 1 : index
    %3 = vector.load %arg2[%c0_4, %c1_5] : memref<16x8xf32, #tpu.memory_space<vmem>>, vector<16x1xf32>
    %c0_6 = arith.constant 0 : index
    %c2 = arith.constant 2 : index
    %4 = vector.load %arg2[%c0_6, %c2] : memref<16x8xf32, #tpu.memory_space<vmem>>, vector<16x1xf32>
    %c0_7 = arith.constant 0 : index
    %c3 = arith.constant 3 : index
    %5 = vector.load %arg2[%c0_7, %c3] : memref<16x8xf32, #tpu.memory_space<vmem>>, vector<16x1xf32>
    %c0_8 = arith.constant 0 : index
    %c4 = arith.constant 4 : index
    %6 = vector.load %arg2[%c0_8, %c4] : memref<16x8xf32, #tpu.memory_space<vmem>>, vector<16x1xf32>
    %c0_9 = arith.constant 0 : index
    %c5 = arith.constant 5 : index
    %7 = vector.load %arg2[%c0_9, %c5] : memref<16x8xf32, #tpu.memory_space<vmem>>, vector<16x1xf32>
    %c0_10 = arith.constant 0 : index
    %c6 = arith.constant 6 : index
    %8 = vector.load %arg2[%c0_10, %c6] : memref<16x8xf32, #tpu.memory_space<vmem>>, vector<16x1xf32>
    %c0_11 = arith.constant 0 : index
    %c7 = arith.constant 7 : index
    %9 = vector.load %arg2[%c0_11, %c7] : memref<16x8xf32, #tpu.memory_space<vmem>>, vector<16x1xf32>
    %10 = vector.broadcast %0 : vector<1x256xf32> to vector<16x256xf32>
    %11 = vector.broadcast %2 : vector<16x1xf32> to vector<16x256xf32>
    %12 = arith.subf %10, %11 : vector<16x256xf32>
    %13 = vector.broadcast %1 : vector<1x256xf32> to vector<16x256xf32>
    %14 = vector.broadcast %3 : vector<16x1xf32> to vector<16x256xf32>
    %15 = arith.subf %13, %14 : vector<16x256xf32>
    %16 = vector.broadcast %4 : vector<16x1xf32> to vector<16x256xf32>
    %17 = arith.mulf %15, %16 : vector<16x256xf32>
    %18 = vector.broadcast %5 : vector<16x1xf32> to vector<16x256xf32>
    %19 = arith.mulf %12, %18 : vector<16x256xf32>
    %20 = arith.subf %17, %19 : vector<16x256xf32>
    %21 = vector.broadcast %5 : vector<16x1xf32> to vector<16x256xf32>
    %22 = arith.mulf %15, %21 : vector<16x256xf32>
    %23 = vector.broadcast %4 : vector<16x1xf32> to vector<16x256xf32>
    %24 = arith.mulf %12, %23 : vector<16x256xf32>
    %25 = arith.addf %22, %24 : vector<16x256xf32>
    %26 = vector.broadcast %6 : vector<16x1xf32> to vector<16x256xf32>
    %27 = arith.mulf %25, %26 : vector<16x256xf32>
    %28 = vector.broadcast %7 : vector<16x1xf32> to vector<16x256xf32>
    %29 = arith.mulf %20, %28 : vector<16x256xf32>
    %30 = arith.mulf %27, %27 : vector<16x256xf32>
    %cst = arith.constant -5.000000e-01 : f32
    %31 = vector.broadcast %cst : f32 to vector<16x256xf32>
    %32 = arith.mulf %31, %30 : vector<16x256xf32>
    %33 = arith.mulf %29, %29 : vector<16x256xf32>
    %cst_12 = arith.constant 5.000000e-01 : f32
    %34 = vector.broadcast %cst_12 : f32 to vector<16x256xf32>
    %35 = arith.mulf %34, %33 : vector<16x256xf32>
    %36 = arith.subf %32, %35 : vector<16x256xf32>
    %37 = math.exp %36 : vector<16x256xf32>
    %cst_13 = arith.constant 5.000000e-01 : f32
    %38 = vector.broadcast %cst_13 : f32 to vector<16x256xf32>
    %39 = arith.mulf %37, %38 : vector<16x256xf32>
    %40 = vector.broadcast %8 : vector<16x1xf32> to vector<16x256xf32>
    %41 = arith.mulf %40, %20 : vector<16x256xf32>
    %42 = vector.broadcast %9 : vector<16x1xf32> to vector<16x256xf32>
    %43 = arith.addf %41, %42 : vector<16x256xf32>
    %44 = math.cos %43 : vector<16x256xf32>
    %45 = arith.mulf %39, %44 : vector<16x256xf32>
    %c0_14 = arith.constant 0 : index
    %c0_15 = arith.constant 0 : index
    %46 = vector.load %arg3[%c0_14, %c0_15] : memref<16x256xf32, #tpu.memory_space<vmem>>, vector<16x256xf32>
    tpu.vector_store %arg3[%c0_14, %c0_15], %45 {strides = array<i32>} : memref<16x256xf32, #tpu.memory_space<vmem>>, vector<16x256xf32>,
    return
  }
  func.func @transform_0(%arg0: i32) -> (i32, i32) {
    %c0_i32 = arith.constant 0 : i32
    %c0_i32_0 = arith.constant 0 : i32
    %c0_i32_1 = arith.constant 0 : i32
    return %c0_i32, %c0_i32_0 : i32, i32
  }
  func.func @transform_1(%arg0: i32) -> (i32, i32) {
    %c0_i32 = arith.constant 0 : i32
    %c0_i32_0 = arith.constant 0 : i32
    return %arg0, %c0_i32 : i32, i32
  }
  func.func @transform_2(%arg0: i32) -> (i32, i32) {
    %c0_i32 = arith.constant 0 : i32
    %c0_i32_0 = arith.constant 0 : i32
    return %arg0, %c0_i32 : i32, i32
  }
}

</mosaic_0001>

<llo_original>
// kernel: tpu_custom_call.1
$region0: #{tpu_custom_call.1}
  #allocation0 [shape = 'u32[]', space=smem, size = 0x4, offset = 0x4, fixed_abs, tag = 'smem constant byte address 0x4 - core index']
  #allocation1 [shape = 'u32[144,128]{1,0:T(1,128)}', space=vmem, size = 0x12000, scoped, tag = 'internal scratch']
  %s0 = inlined_call_operand.vmem [shape: f32[2,256], index: 0, kind: input, shape index: {}]
  %s1 = inlined_call_operand.vmem [shape: f32[16,8], index: 1, kind: input, shape index: {}]
  %s2 = inlined_call_operand.hbm [shape: f32[16,256], index: 2, kind: output, shape index: {}]
  %s3 = sld [smem:[#allocation0]]
  $region18: #{tpu_custom_call.1} parent=0
    _
  %s5 = ssub.s32 1, %s3
  %s6 = scalar_select 0, %s5, %s3
  $region1: #{tpu_custom_call.1} parent=0
    #allocation2 [shape = 'u8[16384]{0}', space=vmem, size = 0x4000, scoped, tag = 'output window, operand 0, single buffered']
    #allocation3 [shape = 's32[1]{0}', space=sflag, size = 0x4, scoped, tag = 'scoped memory for tpu_custom_call.1']
    %7 = vsyncpa [#allocation3], 0
    // Predicated region
    $region2: #{tpu_custom_call.1} parent=1 // pred_check
      _
    $region3: #{tpu_custom_call.1} parent=1 // pred_check_branch
      %9 = sbr.rel (0) target = $region5
    $region4: #{tpu_custom_call.1} parent=1 // pred_region
      _
    $region5: #{tpu_custom_call.1} parent=1 // pred_fallthru
      _
    // Predicated region
    $region6: #{tpu_custom_call.1} parent=1 // pred_check
      _
    $region7: #{tpu_custom_call.1} parent=1 // pred_check_branch
      %11 = sbr.rel (0) target = $region9
    $region8: #{tpu_custom_call.1} parent=1 // pred_region
      _
    $region9: #{tpu_custom_call.1} parent=1 // pred_fallthru
      _
    %v12 = vld [vmem:[%s0] ss:$2 sm:$0x3]
    %s13 = scalar_lea.vmem %s0, 1
    %v14 = vld [vmem:[%s13] ss:$2 sm:$0x3]
    %v15 = vld [vmem:[%s1] sm:$0xff]
    %v16 = vld [vmem:[%s1 + $0x8] sm:$0xff]
    %v18 = vlaneseq
    %v19 = vshrl.u32 %v18, 7
    %v20 = vsub.s32 0, %v19
    %v21 = vrot.slane %v12, %v20
    %v22 = vlaneseq
    %v23 = vshrl.u32 %v22, 7
    %v24 = vsub.s32 1, %v23
    %v25 = vrot.slane %v12, %v24
    %29 = vset.pattern.permute.xlu0 0
    %30 = vperm.xlu0 %29, %v15
    %v31 = vpop.permute.xlu0 %30
    %34 = vset.pattern.permute.xlu0 0
    %35 = vperm.xlu0 %34, %v16
    %v36 = vpop.permute.xlu0 %35
    %v38 = vsub.f32 %v21, %v31
    %v39 = vsub.f32 %v25, %v31
    %v40 = vsub.f32 %v21, %v36
    %v41 = vsub.f32 %v25, %v36
    %v43 = vlaneseq
    %v44 = vshrl.u32 %v43, 7
    %v45 = vsub.s32 0, %v44
    %v46 = vrot.slane %v14, %v45
    %v47 = vlaneseq
    %v48 = vshrl.u32 %v47, 7
    %v49 = vsub.s32 1, %v48
    %v50 = vrot.slane %v14, %v49
    %53 = vset.pattern.permute.xlu0 1
    %54 = vperm.xlu0 %53, %v15
    %v55 = vpop.permute.xlu0 %54
    %57 = vset.pattern.permute.xlu0 1
    %58 = vperm.xlu0 %57, %v16
    %v59 = vpop.permute.xlu0 %58
    %v61 = vsub.f32 %v46, %v55
    %v62 = vsub.f32 %v50, %v55
    %v63 = vsub.f32 %v46, %v59
    %v64 = vsub.f32 %v50, %v59
    %65 = vset.pattern.permute.xlu0 2
    %66 = vperm.xlu0 %65, %v15
    %v67 = vpop.permute.xlu0 %66
    %69 = vset.pattern.permute.xlu0 2
    %70 = vperm.xlu0 %69, %v16
    %v71 = vpop.permute.xlu0 %70
    %v73 = vmul.f32 %v61, %v67
    %v74 = vmul.f32 %v62, %v67
    %v75 = vmul.f32 %v63, %v71
    %v76 = vmul.f32 %v64, %v71
    %77 = vset.pattern.permute.xlu0 3
    %78 = vperm.xlu0 %77, %v15
    %v79 = vpop.permute.xlu0 %78
    %81 = vset.pattern.permute.xlu0 3
    %82 = vperm.xlu0 %81, %v16
    %v83 = vpop.permute.xlu0 %82
    %v85 = vmul.f32 %v38, %v79
    %v86 = vmul.f32 %v39, %v79
    %v87 = vmul.f32 %v40, %v83
    %v88 = vmul.f32 %v41, %v83
    %v89 = vsub.f32 %v73, %v85
    %v90 = vsub.f32 %v74, %v86
    %v91 = vsub.f32 %v75, %v87
    %v92 = vsub.f32 %v76, %v88
    %v93 = vmul.f32 %v61, %v79
    %v94 = vmul.f32 %v62, %v79
    %v95 = vmul.f32 %v63, %v83
    %v96 = vmul.f32 %v64, %v83
    %v97 = vmul.f32 %v38, %v67
    %v98 = vmul.f32 %v39, %v67
    %v99 = vmul.f32 %v40, %v71
    %v100 = vmul.f32 %v41, %v71
    %v101 = vadd.f32 %v93, %v97
    %v102 = vadd.f32 %v94, %v98
    %v103 = vadd.f32 %v95, %v99
    %v104 = vadd.f32 %v96, %v100
    %105 = vset.pattern.permute.xlu0 4
    %106 = vperm.xlu0 %105, %v15
    %v107 = vpop.permute.xlu0 %106
    %109 = vset.pattern.permute.xlu0 4
    %110 = vperm.xlu0 %109, %v16
    %v111 = vpop.permute.xlu0 %110
    %v113 = vmul.f32 %v101, %v107
    %v114 = vmul.f32 %v102, %v107
    %v115 = vmul.f32 %v103, %v111
    %v116 = vmul.f32 %v104, %v111
    %117 = vset.pattern.permute.xlu0 5
    %118 = vperm.xlu0 %117, %v15
    %v119 = vpop.permute.xlu0 %118
    %121 = vset.pattern.permute.xlu0 5
    %122 = vperm.xlu0 %121, %v16
    %v123 = vpop.permute.xlu0 %122
    %v125 = vmul.f32 %v89, %v119
    %v126 = vmul.f32 %v90, %v119
    %v127 = vmul.f32 %v91, %v123
    %v128 = vmul.f32 %v92, %v123
    %v129 = vmul.f32 %v113, %v113
    %v130 = vmul.f32 %v114, %v114
    %v131 = vmul.f32 %v115, %v115
    %v132 = vmul.f32 %v116, %v116
    %v133 = vmul.f32 %v129, -0.5
    %v134 = vmul.f32 %v130, -0.5
    %v135 = vmul.f32 %v131, -0.5
    %v136 = vmul.f32 %v132, -0.5
    %v137 = vmul.f32 %v125, %v125
    %v138 = vmul.f32 %v126, %v126
    %v139 = vmul.f32 %v127, %v127
    %v140 = vmul.f32 %v128, %v128
    %v141 = vmul.f32 %v137, 0.5
    %v142 = vmul.f32 %v138, 0.5
    %v143 = vmul.f32 %v139, 0.5
    %v144 = vmul.f32 %v140, 0.5
    %v145 = vsub.f32 %v133, %v141
    %v146 = vsub.f32 %v134, %v142
    %v147 = vsub.f32 %v135, %v143
    %v148 = vsub.f32 %v136, %v144
    %v149 = vmul.f32 %v145, 1.442695
    %v150 = vpow.pop %v149
    %v151 = vmul.f32 %v146, 1.442695
    %v152 = vpow.pop %v151
    %v153 = vmul.f32 %v147, 1.442695
    %v154 = vpow.pop %v153
    %v155 = vmul.f32 %v148, 1.442695
    %v156 = vpow.pop %v155
    %v157 = vmul.f32 %v150, 0.5
    %v158 = vmul.f32 %v152, 0.5
    %v159 = vmul.f32 %v154, 0.5
    %v160 = vmul.f32 %v156, 0.5
    %161 = vset.pattern.permute.xlu0 6
    %162 = vperm.xlu0 %161, %v15
    %v163 = vpop.permute.xlu0 %162
    %165 = vset.pattern.permute.xlu0 6
    %166 = vperm.xlu0 %165, %v16
    %v167 = vpop.permute.xlu0 %166
    %v169 = vmul.f32 %v163, %v89
    %v170 = vmul.f32 %v163, %v90
    %v171 = vmul.f32 %v167, %v91
    %v172 = vmul.f32 %v167, %v92
    %173 = vset.pattern.permute.xlu0 7
    %174 = vperm.xlu0 %173, %v15
    %v175 = vpop.permute.xlu0 %174
    %177 = vset.pattern.permute.xlu0 7
    %178 = vperm.xlu0 %177, %v16
    %v179 = vpop.permute.xlu0 %178
    %v181 = vadd.f32 %v169, %v175
    %v182 = vadd.f32 %v170, %v175
    %v183 = vadd.f32 %v171, %v179
    %v184 = vadd.f32 %v172, %v179
    %v185 = vand.u32 2147483647, %v181
    %vm186 = vcmp.le.f32.partialorder %v185, 0.7853982
    %vm187 = vcmp.lt.s32.totalorder %v181, 0
    %v188 = vand.u32 %v181, 2139095040
    %v189 = vshrl.u32 %v188, 23
    %v190 = vsub.s32 %v189, 127
    %v191 = vand.u32 2147483647, %v181
    %v192 = vand.u32 %v191, 8388607
    %v193 = vor.u32 %v192, 8388608
    %v194 = vsub.s32 0, %v193
    %v195 = vadd.s32 %v190, 1
    %vm196 = vcmp.gt.s32.totalorder %v195, 0
    %v197 = vsel %vm196, %v195, 0
    %v198 = vshrl.u32 %v197, 5
    %v199 = vand.u32 %v197, 31
    %v200 = vsub.s32 32, %v199
    %v201 = vshrl.u32 683565275, %v200
    %v202 = vshll.u32 683565275, %v199
    %v203 = vshrl.u32 2475754826, %v200
    %v204 = vor.u32 %v202, %v203
    %v205 = vshll.u32 2475754826, %v199
    %v206 = vshrl.u32 2131351028, %v200
    %v207 = vor.u32 %v205, %v206
    %v208 = vshll.u32 2131351028, %v199
    %v209 = vshrl.u32 2102212464, %v200
    %v210 = vor.u32 %v208, %v209
    %v211 = vshll.u32 2102212464, %v199
    %v212 = vshrl.u32 920167782, %v200
    %v213 = vor.u32 %v211, %v212
    %v214 = vshll.u32 920167782, %v199
    %v215 = vshrl.u32 1326507024, %v200
    %v216 = vor.u32 %v214, %v215
    %vm217 = vcmp.lt.s32.totalorder %v198, 1
    %vm218 = vcmp.lt.s32.totalorder %v198, 2
    %vm219 = vcmp.lt.s32.totalorder %v198, 3
    %vm220 = vcmp.lt.s32.totalorder %v198, 4
    %v221 = vsel %vm217, %v201, %v204
    %v222 = vsel %vm220, %v210, 2102212464
    %v223 = vsel %vm219, %v207, %v222
    %v224 = vsel %vm218, %v221, %v223
    %v225 = vsel %vm217, %v204, %v207
    %v226 = vsel %vm220, %v213, 920167782
    %v227 = vsel %vm219, %v210, %v226
    %v228 = vsel %vm218, %v225, %v227
    %v229 = vsel %vm217, %v207, %v210
    %v230 = vsel %vm220, %v216, 1326507024
    %v231 = vsel %vm219, %v213, %v230
    %v232 = vsel %vm218, %v229, %v231
    %v233 = vshll.u32 %v193, 8
    %v234 = vmul.u32.u64.compose %v233, %v232
    %v235 = vextract.low.u32 %v234
    %v236 = vextract.high.u32 %v234
    %v237 = vmul.u32.u64.compose %v233, %v228
    %v238 = vextract.low.u32 %v237
    %v239 = vextract.high.u32 %v237
    %v240 = vmul.u32 %v233, %v224
    %v241 = vadd.s32 %v236, %v238
    %vm242 = vc.u32 %v236, %v238
    %v243 = vadd.s32 %v239, 1
    %v244 = vsel %vm242, %v243, %v239
    %v245 = vadd.s32 %v240, %v244
    %v246 = vadd.s32 %v245, 536870912
    %v247 = vshrl.u32 %v246, 30
    %v248 = vshll.u32 %v247, 30
    %v249 = vsub.s32 %v245, %v248
    %vm250 = vcmp.lt.s32.totalorder %v249, 0
    %v251 = vsub.s32 0, %v249
    %v252 = vsel %vm250, %v251, %v249
    %v253 = vclz %v252
    %v254 = vsub.s32 %v253, 2
    %vm255 = vcmp.gt.s32.totalorder 0, %v254
    %v256 = vsel %vm255, 0, %v254
    %v257 = vsub.s32 32, %v256
    %v258 = vshll.u32 %v249, %v256
    %v259 = vshrl.u32 %v241, %v257
    %v260 = vor.u32 %v258, %v259
    %v261 = vsub.s32 4294967266, %v256
    %v262 = vadd.s32 %v261, 127
    %v263 = vshll.u32 %v262, 23
    %v264 = vor.u32 4788187, %v263
    %v265 = vand.u32 2147483647, %v264
    %v267 = vcvt.s32.f32 %v260
    %v268 = vmul.f32 %v267, %v265
    %v269 = vxor.u32 %v268, 2147483648
    %v270 = vsel %vm187, %v269, %v268
    %v271 = vsub.s32 4, %v247
    %v272 = vsel %vm187, %v271, %v247
    %v273 = vsel %vm186, %v181, %v270
    %v274 = vsel %vm186, 0, %v272
    %v275 = vcosq.f32.pop %v273
    %v276 = vsinq.f32.pop %v273
    %vm277 = vweird.f32 %v181
    %v278 = vand.u32 %v274, 3
    %vm279 = vcmp.lt.s32.totalorder %v278, 2
    %vm280 = vcmp.eq.s32.totalorder %v278, 0
    %v281 = vxor.u32 %v276, 2147483648
    %v282 = vsel %vm280, %v275, %v281
    %vm283 = vcmp.eq.s32.totalorder %v278, 2
    %v284 = vxor.u32 %v275, 2147483648
    %v285 = vsel %vm283, %v284, %v276
    %v286 = vsel %vm279, %v282, %v285
    %v287 = vsel %vm277, nan, %v286
    %v288 = vand.u32 2147483647, %v182
    %vm289 = vcmp.le.f32.partialorder %v288, 0.7853982
    %vm290 = vcmp.lt.s32.totalorder %v182, 0
    %v291 = vand.u32 %v182, 2139095040
    %v292 = vshrl.u32 %v291, 23
    %v293 = vsub.s32 %v292, 127
    %v294 = vand.u32 2147483647, %v182
    %v295 = vand.u32 %v294, 8388607
    %v296 = vor.u32 %v295, 8388608
    %v297 = vsub.s32 0, %v296
    %v298 = vadd.s32 %v293, 1
    %vm299 = vcmp.gt.s32.totalorder %v298, 0
    %v300 = vsel %vm299, %v298, 0
    %v301 = vshrl.u32 %v300, 5
    %v302 = vand.u32 %v300, 31
    %v303 = vsub.s32 32, %v302
    %v304 = vshrl.u32 683565275, %v303
    %v305 = vshll.u32 683565275, %v302
    %v306 = vshrl.u32 2475754826, %v303
    %v307 = vor.u32 %v305, %v306
    %v308 = vshll.u32 2475754826, %v302
    %v309 = vshrl.u32 2131351028, %v303
    %v310 = vor.u32 %v308, %v309
    %v311 = vshll.u32 2131351028, %v302
    %v312 = vshrl.u32 2102212464, %v303
    %v313 = vor.u32 %v311, %v312
    %v314 = vshll.u32 2102212464, %v302
    %v315 = vshrl.u32 920167782, %v303
    %v316 = vor.u32 %v314, %v315
    %v317 = vshll.u32 920167782, %v302
    %v318 = vshrl.u32 1326507024, %v303
    %v319 = vor.u32 %v317, %v318
    %vm320 = vcmp.lt.s32.totalorder %v301, 1
    %vm321 = vcmp.lt.s32.totalorder %v301, 2
    %vm322 = vcmp.lt.s32.totalorder %v301, 3
    %vm323 = vcmp.lt.s32.totalorder %v301, 4
    %v324 = vsel %vm320, %v304, %v307
    %v325 = vsel %vm323, %v313, 2102212464
    %v326 = vsel %vm322, %v310, %v325
    %v327 = vsel %vm321, %v324, %v326
    %v328 = vsel %vm320, %v307, %v310
    %v329 = vsel %vm323, %v316, 920167782
    %v330 = vsel %vm322, %v313, %v329
    %v331 = vsel %vm321, %v328, %v330
    %v332 = vsel %vm320, %v310, %v313
    %v333 = vsel %vm323, %v319, 1326507024
    %v334 = vsel %vm322, %v316, %v333
    %v335 = vsel %vm321, %v332, %v334
    %v336 = vshll.u32 %v296, 8
    %v337 = vmul.u32.u64.compose %v336, %v335
    %v338 = vextract.low.u32 %v337
    %v339 = vextract.high.u32 %v337
    %v340 = vmul.u32.u64.compose %v336, %v331
    %v341 = vextract.low.u32 %v340
    %v342 = vextract.high.u32 %v340
    %v343 = vmul.u32 %v336, %v327
    %v344 = vadd.s32 %v339, %v341
    %vm345 = vc.u32 %v339, %v341
    %v346 = vadd.s32 %v342, 1
    %v347 = vsel %vm345, %v346, %v342
    %v348 = vadd.s32 %v343, %v347
    %v349 = vadd.s32 %v348, 536870912
    %v350 = vshrl.u32 %v349, 30
    %v351 = vshll.u32 %v350, 30
    %v352 = vsub.s32 %v348, %v351
    %vm353 = vcmp.lt.s32.totalorder %v352, 0
    %v354 = vsub.s32 0, %v352
    %v355 = vsel %vm353, %v354, %v352
    %v356 = vclz %v355
    %v357 = vsub.s32 %v356, 2
    %vm358 = vcmp.gt.s32.totalorder 0, %v357
    %v359 = vsel %vm358, 0, %v357
    %v360 = vsub.s32 32, %v359
    %v361 = vshll.u32 %v352, %v359
    %v362 = vshrl.u32 %v344, %v360
    %v363 = vor.u32 %v361, %v362
    %v364 = vsub.s32 4294967266, %v359
    %v365 = vadd.s32 %v364, 127
    %v366 = vshll.u32 %v365, 23
    %v367 = vor.u32 4788187, %v366
    %v368 = vand.u32 2147483647, %v367
    %v370 = vcvt.s32.f32 %v363
    %v371 = vmul.f32 %v370, %v368
    %v372 = vxor.u32 %v371, 2147483648
    %v373 = vsel %vm290, %v372, %v371
    %v374 = vsub.s32 4, %v350
    %v375 = vsel %vm290, %v374, %v350
    %v376 = vsel %vm289, %v182, %v373
    %v377 = vsel %vm289, 0, %v375
    %v378 = vcosq.f32.pop %v376
    %v379 = vsinq.f32.pop %v376
    %vm380 = vweird.f32 %v182
    %v381 = vand.u32 %v377, 3
    %vm382 = vcmp.lt.s32.totalorder %v381, 2
    %vm383 = vcmp.eq.s32.totalorder %v381, 0
    %v384 = vxor.u32 %v379, 2147483648
    %v385 = vsel %vm383, %v378, %v384
    %vm386 = vcmp.eq.s32.totalorder %v381, 2
    %v387 = vxor.u32 %v378, 2147483648
    %v388 = vsel %vm386, %v387, %v379
    %v389 = vsel %vm382, %v385, %v388
    %v390 = vsel %vm380, nan, %v389
    %v391 = vand.u32 2147483647, %v183
    %vm392 = vcmp.le.f32.partialorder %v391, 0.7853982
    %vm393 = vcmp.lt.s32.totalorder %v183, 0
    %v394 = vand.u32 %v183, 2139095040
    %v395 = vshrl.u32 %v394, 23
    %v396 = vsub.s32 %v395, 127
    %v397 = vand.u32 2147483647, %v183
    %v398 = vand.u32 %v397, 8388607
    %v399 = vor.u32 %v398, 8388608
    %v400 = vsub.s32 0, %v399
    %v401 = vadd.s32 %v396, 1
    %vm402 = vcmp.gt.s32.totalorder %v401, 0
    %v403 = vsel %vm402, %v401, 0
    %v404 = vshrl.u32 %v403, 5
    %v405 = vand.u32 %v403, 31
    %v406 = vsub.s32 32, %v405
    %v407 = vshrl.u32 683565275, %v406
    %v408 = vshll.u32 683565275, %v405
    %v409 = vshrl.u32 2475754826, %v406
    %v410 = vor.u32 %v408, %v409
    %v411 = vshll.u32 2475754826, %v405
    %v412 = vshrl.u32 2131351028, %v406
    %v413 = vor.u32 %v411, %v412
    %v414 = vshll.u32 2131351028, %v405
    %v415 = vshrl.u32 2102212464, %v406
    %v416 = vor.u32 %v414, %v415
    %v417 = vshll.u32 2102212464, %v405
    %v418 = vshrl.u32 920167782, %v406
    %v419 = vor.u32 %v417, %v418
    %v420 = vshll.u32 920167782, %v405
    %v421 = vshrl.u32 1326507024, %v406
    %v422 = vor.u32 %v420, %v421
    %vm423 = vcmp.lt.s32.totalorder %v404, 1
    %vm424 = vcmp.lt.s32.totalorder %v404, 2
    %vm425 = vcmp.lt.s32.totalorder %v404, 3
    %vm426 = vcmp.lt.s32.totalorder %v404, 4
    %v427 = vsel %vm423, %v407, %v410
    %v428 = vsel %vm426, %v416, 2102212464
    %v429 = vsel %vm425, %v413, %v428
    %v430 = vsel %vm424, %v427, %v429
    %v431 = vsel %vm423, %v410, %v413
    %v432 = vsel %vm426, %v419, 920167782
    %v433 = vsel %vm425, %v416, %v432
    %v434 = vsel %vm424, %v431, %v433
    %v435 = vsel %vm423, %v413, %v416
    %v436 = vsel %vm426, %v422, 1326507024
    %v437 = vsel %vm425, %v419, %v436
    %v438 = vsel %vm424, %v435, %v437
    %v439 = vshll.u32 %v399, 8
    %v440 = vmul.u32.u64.compose %v439, %v438
    %v441 = vextract.low.u32 %v440
    %v442 = vextract.high.u32 %v440
    %v443 = vmul.u32.u64.compose %v439, %v434
    %v444 = vextract.low.u32 %v443
    %v445 = vextract.high.u32 %v443
    %v446 = vmul.u32 %v439, %v430
    %v447 = vadd.s32 %v442, %v444
    %vm448 = vc.u32 %v442, %v444
    %v449 = vadd.s32 %v445, 1
    %v450 = vsel %vm448, %v449, %v445
    %v451 = vadd.s32 %v446, %v450
    %v452 = vadd.s32 %v451, 536870912
    %v453 = vshrl.u32 %v452, 30
    %v454 = vshll.u32 %v453, 30
    %v455 = vsub.s32 %v451, %v454
    %vm456 = vcmp.lt.s32.totalorder %v455, 0
    %v457 = vsub.s32 0, %v455
    %v458 = vsel %vm456, %v457, %v455
    %v459 = vclz %v458
    %v460 = vsub.s32 %v459, 2
    %vm461 = vcmp.gt.s32.totalorder 0, %v460
    %v462 = vsel %vm461, 0, %v460
    %v463 = vsub.s32 32, %v462
    %v464 = vshll.u32 %v455, %v462
    %v465 = vshrl.u32 %v447, %v463
    %v466 = vor.u32 %v464, %v465
    %v467 = vsub.s32 4294967266, %v462
    %v468 = vadd.s32 %v467, 127
    %v469 = vshll.u32 %v468, 23
    %v470 = vor.u32 4788187, %v469
    %v471 = vand.u32 2147483647, %v470
    %v473 = vcvt.s32.f32 %v466
    %v474 = vmul.f32 %v473, %v471
    %v475 = vxor.u32 %v474, 2147483648
    %v476 = vsel %vm393, %v475, %v474
    %v477 = vsub.s32 4, %v453
    %v478 = vsel %vm393, %v477, %v453
    %v479 = vsel %vm392, %v183, %v476
    %v480 = vsel %vm392, 0, %v478
    %v481 = vcosq.f32.pop %v479
    %v482 = vsinq.f32.pop %v479
    %vm483 = vweird.f32 %v183
    %v484 = vand.u32 %v480, 3
    %vm485 = vcmp.lt.s32.totalorder %v484, 2
    %vm486 = vcmp.eq.s32.totalorder %v484, 0
    %v487 = vxor.u32 %v482, 2147483648
    %v488 = vsel %vm486, %v481, %v487
    %vm489 = vcmp.eq.s32.totalorder %v484, 2
    %v490 = vxor.u32 %v481, 2147483648
    %v491 = vsel %vm489, %v490, %v482
    %v492 = vsel %vm485, %v488, %v491
    %v493 = vsel %vm483, nan, %v492
    %v494 = vand.u32 2147483647, %v184
    %vm495 = vcmp.le.f32.partialorder %v494, 0.7853982
    %vm496 = vcmp.lt.s32.totalorder %v184, 0
    %v497 = vand.u32 %v184, 2139095040
    %v498 = vshrl.u32 %v497, 23
    %v499 = vsub.s32 %v498, 127
    %v500 = vand.u32 2147483647, %v184
    %v501 = vand.u32 %v500, 8388607
    %v502 = vor.u32 %v501, 8388608
    %v503 = vsub.s32 0, %v502
    %v504 = vadd.s32 %v499, 1
    %vm505 = vcmp.gt.s32.totalorder %v504, 0
    %v506 = vsel %vm505, %v504, 0
    %v507 = vshrl.u32 %v506, 5
    %v508 = vand.u32 %v506, 31
    %v509 = vsub.s32 32, %v508
    %v510 = vshrl.u32 683565275, %v509
    %v511 = vshll.u32 683565275, %v508
    %v512 = vshrl.u32 2475754826, %v509
    %v513 = vor.u32 %v511, %v512
    %v514 = vshll.u32 2475754826, %v508
    %v515 = vshrl.u32 2131351028, %v509
    %v516 = vor.u32 %v514, %v515
    %v517 = vshll.u32 2131351028, %v508
    %v518 = vshrl.u32 2102212464, %v509
    %v519 = vor.u32 %v517, %v518
    %v520 = vshll.u32 2102212464, %v508
    %v521 = vshrl.u32 920167782, %v509
    %v522 = vor.u32 %v520, %v521
    %v523 = vshll.u32 920167782, %v508
    %v524 = vshrl.u32 1326507024, %v509
    %v525 = vor.u32 %v523, %v524
    %vm526 = vcmp.lt.s32.totalorder %v507, 1
    %vm527 = vcmp.lt.s32.totalorder %v507, 2
    %vm528 = vcmp.lt.s32.totalorder %v507, 3
    %vm529 = vcmp.lt.s32.totalorder %v507, 4
    %v530 = vsel %vm526, %v510, %v513
    %v531 = vsel %vm529, %v519, 2102212464
    %v532 = vsel %vm528, %v516, %v531
    %v533 = vsel %vm527, %v530, %v532
    %v534 = vsel %vm526, %v513, %v516
    %v535 = vsel %vm529, %v522, 920167782
    %v536 = vsel %vm528, %v519, %v535
    %v537 = vsel %vm527, %v534, %v536
    %v538 = vsel %vm526, %v516, %v519
    %v539 = vsel %vm529, %v525, 1326507024
    %v540 = vsel %vm528, %v522, %v539
    %v541 = vsel %vm527, %v538, %v540
    %v542 = vshll.u32 %v502, 8
    %v543 = vmul.u32.u64.compose %v542, %v541
    %v544 = vextract.low.u32 %v543
    %v545 = vextract.high.u32 %v543
    %v546 = vmul.u32.u64.compose %v542, %v537
    %v547 = vextract.low.u32 %v546
    %v548 = vextract.high.u32 %v546
    %v549 = vmul.u32 %v542, %v533
    %v550 = vadd.s32 %v545, %v547
    %vm551 = vc.u32 %v545, %v547
    %v552 = vadd.s32 %v548, 1
    %v553 = vsel %vm551, %v552, %v548
    %v554 = vadd.s32 %v549, %v553
    %v555 = vadd.s32 %v554, 536870912
    %v556 = vshrl.u32 %v555, 30
    %v557 = vshll.u32 %v556, 30
    %v558 = vsub.s32 %v554, %v557
    %vm559 = vcmp.lt.s32.totalorder %v558, 0
    %v560 = vsub.s32 0, %v558
    %v561 = vsel %vm559, %v560, %v558
    %v562 = vclz %v561
    %v563 = vsub.s32 %v562, 2
    %vm564 = vcmp.gt.s32.totalorder 0, %v563
    %v565 = vsel %vm564, 0, %v563
    %v566 = vsub.s32 32, %v565
    %v567 = vshll.u32 %v558, %v565
    %v568 = vshrl.u32 %v550, %v566
    %v569 = vor.u32 %v567, %v568
    %v570 = vsub.s32 4294967266, %v565
    %v571 = vadd.s32 %v570, 127
    %v572 = vshll.u32 %v571, 23
    %v573 = vor.u32 4788187, %v572
    %v574 = vand.u32 2147483647, %v573
    %v576 = vcvt.s32.f32 %v569
    %v577 = vmul.f32 %v576, %v574
    %v578 = vxor.u32 %v577, 2147483648
    %v579 = vsel %vm496, %v578, %v577
    %v580 = vsub.s32 4, %v556
    %v581 = vsel %vm496, %v580, %v556
    %v582 = vsel %vm495, %v184, %v579
    %v583 = vsel %vm495, 0, %v581
    %v584 = vcosq.f32.pop %v582
    %v585 = vsinq.f32.pop %v582
    %vm586 = vweird.f32 %v184
    %v587 = vand.u32 %v583, 3
    %vm588 = vcmp.lt.s32.totalorder %v587, 2
    %vm589 = vcmp.eq.s32.totalorder %v587, 0
    %v590 = vxor.u32 %v585, 2147483648
    %v591 = vsel %vm589, %v584, %v590
    %vm592 = vcmp.eq.s32.totalorder %v587, 2
    %v593 = vxor.u32 %v584, 2147483648
    %v594 = vsel %vm592, %v593, %v585
    %v595 = vsel %vm588, %v591, %v594
    %v596 = vsel %vm586, nan, %v595
    %v597 = vmul.f32 %v157, %v287
    %v598 = vmul.f32 %v158, %v390
    %v599 = vmul.f32 %v159, %v493
    %v600 = vmul.f32 %v160, %v596
    %601 = vst [vmem:[#allocation2] sm:$0xff] %v597
    %602 = vst [vmem:[#allocation2 + $0x8] sm:$0xff] %v598
    %603 = vst [vmem:[#allocation2 + $0x10] sm:$0xff] %v599
    %604 = vst [vmem:[#allocation2 + $0x18] sm:$0xff] %v600
    // Predicated region
    $region10: #{tpu_custom_call.1} parent=1 // pred_check
      _
    $region11: #{tpu_custom_call.1} parent=1 // pred_check_branch
      %606 = sbr.rel (0) target = $region13
    $region12: #{tpu_custom_call.1} parent=1 // pred_region
      %s608 = ssub.s32 512, 512
      %609 = vsyncadd [#allocation3], %s608
      %s610 = sshll.u32 [#allocation2], 4
      %s611 = int_to_ptr.vmem [resolvable:$true] %s610
      %616 = dma.vmem_to_hbm [thread:$0]  %s611, 512, %s2, [#allocation3], 256, 256, 16
    $region13: #{tpu_custom_call.1} parent=1 // pred_fallthru
      _
    // Predicated region
    $region14: #{tpu_custom_call.1} parent=1 // pred_check
      _
    $region15: #{tpu_custom_call.1} parent=1 // pred_check_branch
      %618 = sbr.rel (0) target = $region17
    $region16: #{tpu_custom_call.1} parent=1 // pred_region
      %619 = dma.done [#allocation3], 512
    $region17: #{tpu_custom_call.1} parent=1 // pred_fallthru
      _
    %620 = vsyncpa [#allocation3], 1

</llo_original>
